<compile_context>
chip_gen: v7x
topology: tpu7x:2x2x1
jax: 0.10.0
libtpu: 0.0.40
codegen_flags: <defaults>
</compile_context>

<pallas_src>
import functools

import jax
import jax.numpy as jnp
from jax.experimental import pallas as pl
from jax.experimental.pallas import tpu as pltpu


def _round_up(x, m):
  return (x + m - 1) // m * m


def _gru_ode_kernel(diff_ref, h_ref, w_rz_ref, w_hh_ref, dh_ref, *, hp):
  """One batch tile of the autonomous GRU-ODE cell.

  diff_ref : SMEM (1,) f32 scalar dt.
  h_ref    : VMEM (TB, Hp) hidden-state tile (input dtype).
  w_rz_ref : VMEM (Hp, 2*Hp) fused [Wr^T | Wz^T] (input dtype), VMEM-resident.
  w_hh_ref : VMEM (Hp, Hp) Wh^T (input dtype), VMEM-resident.
  dh_ref   : VMEM (TB, Hp) output tile.
  """
  h = h_ref[...]                       # keep MXU inputs in the native dtype
  hf = h.astype(jnp.float32)           # elementwise math in f32 (v5e-safe)

  # Fused r/z matmul: one MXU weight push over the shared LHS. f32 accumulate.
  rz = jnp.dot(h, w_rz_ref[...], preferred_element_type=jnp.float32)
  r = jax.nn.sigmoid(rz[:, :hp])
  z = jax.nn.sigmoid(rz[:, hp:])

  # u = tanh(lin_hh(r * h)); cast back to the MXU input dtype at the boundary.
  rh = (r * hf).astype(h.dtype)
  u = jnp.tanh(jnp.dot(rh, w_hh_ref[...], preferred_element_type=jnp.float32))

  diff = diff_ref[0]                   # scalar dt from SMEM
  dh = (1.0 - z) * (u - hf) * diff
  dh_ref[...] = dh.astype(dh_ref.dtype)


def prepare_gru_ode_weights(w_hr, w_hz, w_hh, *, compute_dtype=jnp.float32):
  """Pad to lane-aligned Hp, transpose to (in, out), fuse [Wr | Wz].

  The result is constant across ODE steps — hoist this call out of the
  integration loop so the per-step kernel sees ready-to-use weights.
  For large hidden sizes pass compute_dtype=jnp.bfloat16 to halve VMEM/HBM
  traffic and use the fast MXU path (f32 accumulation is kept in-kernel).
  """
  h_dim = w_hr.shape[0]
  hp = _round_up(h_dim, 128)

  def pad_t(w):
    w = jnp.asarray(w, compute_dtype)
    wp = jnp.zeros((hp, hp), compute_dtype).at[:h_dim, :h_dim].set(w)
    return wp.T                                   # (in_pad, out_pad) == W^T

  w_rz = jnp.concatenate([pad_t(w_hr), pad_t(w_hz)], axis=1)   # (Hp, 2*Hp)
  w_hh_t = pad_t(w_hh)                                         # (Hp, Hp)
  return w_rz, w_hh_t


@jax.jit
def gru_ode_step(h, diff, w_rz, w_hh_t):
  """dh = (1 - z) * (u - h) * diff for one autonomous GRU-ODE step."""
  b, h_dim = h.shape
  hp = w_hh_t.shape[0]
  dtype = h.dtype
  itemsize = jnp.dtype(dtype).itemsize

  # Batch tile: multiple of the dtype sublane tile (8 f32 / 16 bf16), capped.
  sub = max(8, 32 // itemsize)
  tb = min(256, _round_up(b, sub))
  b_pad = _round_up(b, tb)

  h_pad = jnp.pad(h, ((0, b_pad - b), (0, hp - h_dim)))
  diff_s = jnp.reshape(jnp.asarray(diff, jnp.float32), (1,))

  # VMEM budget: resident weights + double-buffered h/dh tiles + headroom.
  w_bytes = (w_rz.size + w_hh_t.size) * jnp.dtype(w_rz.dtype).itemsize
  tile_bytes = tb * hp * itemsize
  vmem_limit = int(min(max(w_bytes + 8 * tile_bytes + (4 << 20), 16 << 20),
                       64 << 20))  # stay inside the v7x 64 MiB budget

  cost = pl.CostEstimate(
      flops=2 * b_pad * hp * (3 * hp),            # (B,Hp)x(Hp,2Hp) + (B,Hp)x(Hp,Hp)
      transcendentals=3 * b_pad * hp,             # 2 sigmoids + 1 tanh
      bytes_accessed=int(w_bytes + 2 * b_pad * hp * itemsize + 4))

  dh_pad = pl.pallas_call(
      functools.partial(_gru_ode_kernel, hp=hp),
      out_shape=jax.ShapeDtypeStruct((b_pad, hp), dtype),
      grid=(b_pad // tb,),
      in_specs=[
          pl.BlockSpec(memory_space=pltpu.MemorySpace.SMEM),   # diff scalar
          pl.BlockSpec((tb, hp), lambda i: (i, 0)),            # h batch tile
          pl.BlockSpec((hp, 2 * hp), lambda i: (0, 0)),        # fused Wr|Wz (resident)
          pl.BlockSpec((hp, hp), lambda i: (0, 0)),            # Wh (resident)
      ],
      out_specs=pl.BlockSpec((tb, hp), lambda i: (i, 0)),
      compiler_params=pltpu.CompilerParams(
          dimension_semantics=("parallel",),                   # megacore on v7x
          vmem_limit_bytes=vmem_limit),
      cost_estimate=cost,
  )(diff_s, h_pad, w_rz, w_hh_t)

  return dh_pad[:b, :h_dim]


def full_gru_ode_cell_autonomous(h, diff, w_hr, w_hz, w_hh):
  """Matches FullGRUODECell_Autonomous.forward(t, (h, diff)).

  Convenience wrapper: prepares (pads/fuses/transposes) the weights per call.
  For repeated ODE stepping call prepare_gru_ode_weights() once outside the
  loop and use gru_ode_step() directly.
  """
  w_rz, w_hh_t = prepare_gru_ode_weights(w_hr, w_hz, w_hh, compute_dtype=h.dtype)
  dh = gru_ode_step(h, diff, w_rz, w_hh_t)
  return dh, jnp.zeros_like(jnp.asarray(diff))


def _reference(h, diff, w_hr, w_hz, w_hh):
  r = jax.nn.sigmoid(h @ w_hr.T)
  z = jax.nn.sigmoid(h @ w_hz.T)
  u = jnp.tanh((r * h) @ w_hh.T)
  return (1.0 - z) * (u - h) * diff


if __name__ == "__main__":
  key = jax.random.PRNGKey(0)
  k_h, k_r, k_z, k_u = jax.random.split(key, 4)

  B, H = 8, 32
  dtype = jnp.float32

  h = jax.random.normal(k_h, (B, H), dtype)
  diff = jnp.asarray(0.05, dtype)  # scalar dt, as used in GRU-ODE stepping

  bound = 1.0 / (H ** 0.5)  # nn.Linear default init analogue
  w_hr = jax.random.uniform(k_r, (H, H), dtype, -bound, bound)
  w_hz = jax.random.uniform(k_z, (H, H), dtype, -bound, bound)
  w_hh = jax.random.uniform(k_u, (H, H), dtype, -bound, bound)

  # Hoisted weight prep (constant across ODE steps) + step call.
  w_rz, w_hh_t = prepare_gru_ode_weights(w_hr, w_hz, w_hh, compute_dtype=dtype)
  dh = jax.block_until_ready(gru_ode_step(h, diff, w_rz, w_hh_t))

  # Module-shaped wrapper (returns (dh, zeros_like(diff)) like the nn.Module).
  dh2, zero_diff = full_gru_ode_cell_autonomous(h, diff, w_hr, w_hz, w_hh)
  dh2 = jax.block_until_ready(dh2)

  ref = _reference(h, diff, w_hr, w_hz, w_hh)
  assert dh.shape == (B, H)
  assert zero_diff.shape == diff.shape
  assert jnp.allclose(dh, ref, atol=1e-5, rtol=1e-5)
  assert jnp.allclose(dh2, ref, atol=1e-5, rtol=1e-5)

  print("KERNEL_OK")
</pallas_src>

<mosaic_0001>
module attributes {stable_mosaic.version = 11 : i64} {
  func.func @_gru_ode_kernel(%arg0: i32, %arg1: memref<1xf32, #tpu.memory_space<smem>>, %arg2: memref<8x128xf32, #tpu.memory_space<vmem>>, %arg3: memref<128x256xf32, #tpu.memory_space<vmem>>, %arg4: memref<128x128xf32, #tpu.memory_space<vmem>>, %arg5: memref<8x128xf32, #tpu.memory_space<vmem>>) attributes {dimension_semantics = [#tpu.dimension_semantics<parallel>], iteration_bounds = array<i64: 1>, scalar_prefetch = 0 : i64, scratch_operands = 0 : i64, tpu.core_type = #tpu.core_type<tc>, window_params = [{transform_indices = @transform_0, window_bounds = array<i64: 1>}, {transform_indices = @transform_1, window_bounds = array<i64: 8, 128>}, {pipeline_mode = #tpu.pipeline_mode<synchronous>, transform_indices = @transform_2, window_bounds = array<i64: 128, 256>}, {pipeline_mode = #tpu.pipeline_mode<synchronous>, transform_indices = @transform_3, window_bounds = array<i64: 128, 128>}, {transform_indices = @transform_4, window_bounds = array<i64: 8, 128>}]} {
    %c0 = arith.constant 0 : index
    %c0_0 = arith.constant 0 : index
    %0 = vector.load %arg2[%c0, %c0_0] : memref<8x128xf32, #tpu.memory_space<vmem>>, vector<8x128xf32>
    %c0_1 = arith.constant 0 : index
    %c0_2 = arith.constant 0 : index
    %1 = vector.load %arg3[%c0_1, %c0_2] : memref<128x256xf32, #tpu.memory_space<vmem>>, vector<128x256xf32>
    %cst = arith.constant dense<0.000000e+00> : vector<8x256xf32>
    %2 = tpu.matmul %0, %1, %cst {dimension_numbers = #tpu.dot_dimension_numbers<[1], [0], [0], [1], [0, 0, 1, 1], [], []>} : vector<8x128xf32>, vector<128x256xf32>, vector<8x256xf32> -> vector<8x256xf32>
    %3 = vector.extract_strided_slice %2 {offsets = [0, 0], sizes = [8, 128], strides = [1, 1]} : vector<8x256xf32> to vector<8x128xf32>
    %4 = arith.negf %3 : vector<8x128xf32>
    %5 = math.exp %4 : vector<8x128xf32>
    %cst_3 = arith.constant 1.000000e+00 : f32
    %6 = vector.broadcast %cst_3 : f32 to vector<8x128xf32>
    %7 = arith.addf %6, %5 : vector<8x128xf32>
    %8 = arith.divf %6, %7 : vector<8x128xf32>
    %9 = vector.extract_strided_slice %2 {offsets = [0, 128], sizes = [8, 128], strides = [1, 1]} : vector<8x256xf32> to vector<8x128xf32>
    %10 = arith.negf %9 : vector<8x128xf32>
    %11 = math.exp %10 : vector<8x128xf32>
    %cst_4 = arith.constant 1.000000e+00 : f32
    %12 = vector.broadcast %cst_4 : f32 to vector<8x128xf32>
    %13 = arith.addf %12, %11 : vector<8x128xf32>
    %14 = arith.divf %12, %13 : vector<8x128xf32>
    %15 = arith.mulf %8, %0 : vector<8x128xf32>
    %c0_5 = arith.constant 0 : index
    %c0_6 = arith.constant 0 : index
    %16 = vector.load %arg4[%c0_5, %c0_6] : memref<128x128xf32, #tpu.memory_space<vmem>>, vector<128x128xf32>
    %cst_7 = arith.constant dense<0.000000e+00> : vector<8x128xf32>
    %17 = tpu.matmul %15, %16, %cst_7 {dimension_numbers = #tpu.dot_dimension_numbers<[1], [0], [0], [1], [0, 0, 1, 1], [], []>} : vector<8x128xf32>, vector<128x128xf32>, vector<8x128xf32> -> vector<8x128xf32>
    %18 = math.tanh %17 : vector<8x128xf32>
    %c0_8 = arith.constant 0 : index
    %19 = memref.load %arg1[%c0_8] : memref<1xf32, #tpu.memory_space<smem>>
    %cst_9 = arith.constant 1.000000e+00 : f32
    %20 = vector.broadcast %cst_9 : f32 to vector<8x128xf32>
    %21 = arith.subf %20, %14 : vector<8x128xf32>
    %22 = arith.subf %18, %0 : vector<8x128xf32>
    %23 = arith.mulf %21, %22 : vector<8x128xf32>
    %24 = vector.broadcast %19 : f32 to vector<8x128xf32>
    %25 = arith.mulf %23, %24 : vector<8x128xf32>
    %c0_10 = arith.constant 0 : index
    %c0_11 = arith.constant 0 : index
    %26 = vector.load %arg5[%c0_10, %c0_11] : memref<8x128xf32, #tpu.memory_space<vmem>>, vector<8x128xf32>
    tpu.vector_store %arg5[%c0_10, %c0_11], %25 {strides = array<i32>} : memref<8x128xf32, #tpu.memory_space<vmem>>, vector<8x128xf32>,
    return
  }
  func.func @transform_0(%arg0: i32) -> i32 {
    %c0_i32 = arith.constant 0 : i32
    %c0_i32_0 = arith.constant 0 : i32
    return %c0_i32 : i32
  }
  func.func @transform_1(%arg0: i32) -> (i32, i32) {
    %c0_i32 = arith.constant 0 : i32
    %c0_i32_0 = arith.constant 0 : i32
    return %arg0, %c0_i32 : i32, i32
  }
  func.func @transform_2(%arg0: i32) -> (i32, i32) {
    %c0_i32 = arith.constant 0 : i32
    %c0_i32_0 = arith.constant 0 : i32
    %c0_i32_1 = arith.constant 0 : i32
    return %c0_i32, %c0_i32_0 : i32, i32
  }
  func.func @transform_3(%arg0: i32) -> (i32, i32) {
    %c0_i32 = arith.constant 0 : i32
    %c0_i32_0 = arith.constant 0 : i32
    %c0_i32_1 = arith.constant 0 : i32
    return %c0_i32, %c0_i32_0 : i32, i32
  }
  func.func @transform_4(%arg0: i32) -> (i32, i32) {
    %c0_i32 = arith.constant 0 : i32
    %c0_i32_0 = arith.constant 0 : i32
    return %arg0, %c0_i32 : i32, i32
  }
}

</mosaic_0001>

<llo_original>
// kernel: gru_ode_step.1
$region0: #{gru_ode_step.1}
  #allocation0 [shape = 'u32[]', space=smem, size = 0x4, offset = 0x4, fixed_abs, tag = 'smem constant byte address 0x4 - core index']
  #allocation1 [shape = 'u32[144,128]{1,0:T(1,128)}', space=vmem, size = 0x12000, scoped, tag = 'internal scratch']
  #allocation2 [shape = 'f32[1]{0:T(128)S(6)}', space=smem, size = 0x200, scoped, tag = 'scoped memory for gru_ode_step.1']
  %s0 = inlined_call_operand.<no memory space> [shape: f32[1], index: 0, kind: input, shape index: {}]
  %s1 = inlined_call_operand.vmem [shape: f32[8,128], index: 1, kind: input, shape index: {}]
  %s2 = inlined_call_operand.hbm [shape: f32[128,256], index: 2, kind: input, shape index: {}]
  %s3 = inlined_call_operand.hbm [shape: f32[128,128], index: 3, kind: input, shape index: {}]
  %s4 = inlined_call_operand.hbm [shape: f32[8,128], index: 4, kind: output, shape index: {}]
  %s5 = sld [smem:[#allocation0]]
  $region34: #{gru_ode_step.1} parent=0
    _
  %s7 = ssub.s32 1, %s5
  %s8 = scalar_select 0, %s7, %s5
  %9 = sst [smem:[#allocation2]] %s0
  $region1: #{gru_ode_step.1} parent=0
    #allocation3 [shape = 'u8[131072]{0}', space=vmem, size = 0x20000, scoped, tag = 'input window, operand 2, single buffered']
    #allocation4 [shape = 's32[1]{0}', space=sflag, size = 0x4, scoped, tag = 'scoped memory for gru_ode_step.1']
    #allocation5 [shape = 's32[1]{0}', space=sflag, size = 0x4, scoped, tag = 'scoped memory for gru_ode_step.1']
    #allocation6 [shape = 'u8[65536]{0}', space=vmem, size = 0x10000, scoped, tag = 'input window, operand 3, single buffered']
    #allocation7 [shape = 's32[1]{0}', space=sflag, size = 0x4, scoped, tag = 'scoped memory for gru_ode_step.1']
    #allocation8 [shape = 'u8[4096]{0}', space=vmem, size = 0x1000, scoped, tag = 'output window, operand 0, single buffered']
    %10 = vsyncpa [#allocation4], 0
    %11 = vsyncpa [#allocation7], 0
    %12 = vsyncpa [#allocation5], 0
    // Predicated region
    $region2: #{gru_ode_step.1} parent=1 // pred_check
      _
    $region3: #{gru_ode_step.1} parent=1 // pred_check_branch
      %14 = sbr.rel (0) target = $region5
    $region4: #{gru_ode_step.1} parent=1 // pred_region
      _
    $region5: #{gru_ode_step.1} parent=1 // pred_fallthru
      _
    // Predicated region
    $region6: #{gru_ode_step.1} parent=1 // pred_check
      _
    $region7: #{gru_ode_step.1} parent=1 // pred_check_branch
      %16 = sbr.rel (0) target = $region9
    $region8: #{gru_ode_step.1} parent=1 // pred_region
      _
    $region9: #{gru_ode_step.1} parent=1 // pred_fallthru
      _
    // Predicated region
    $region10: #{gru_ode_step.1} parent=1 // pred_check
      _
    $region11: #{gru_ode_step.1} parent=1 // pred_check_branch
      %18 = sbr.rel (0) target = $region13
    $region12: #{gru_ode_step.1} parent=1 // pred_region
      %s20 = ssub.s32 4096, 4096
      %21 = vsyncadd [#allocation4], %s20
      %s22 = sshll.u32 [#allocation3], 4
      %s23 = int_to_ptr.vmem [resolvable:$true] %s22
      %28 = dma.hbm_to_vmem [thread:$0]  %s2, 4096, %s23, [#allocation4], 256, 256, 16
    $region13: #{gru_ode_step.1} parent=1 // pred_fallthru
      _
    // Predicated region
    $region14: #{gru_ode_step.1} parent=1 // pred_check
      _
    $region15: #{gru_ode_step.1} parent=1 // pred_check_branch
      %30 = sbr.rel (0) target = $region17
    $region16: #{gru_ode_step.1} parent=1 // pred_region
      %s32 = ssub.s32 2048, 2048
      %33 = vsyncadd [#allocation7], %s32
      %s34 = sshll.u32 [#allocation6], 4
      %s35 = int_to_ptr.vmem [resolvable:$true] %s34
      %40 = dma.hbm_to_vmem [thread:$0]  %s3, 2048, %s35, [#allocation7], 128, 128, 8
    $region17: #{gru_ode_step.1} parent=1 // pred_fallthru
      _
    // Predicated region
    $region18: #{gru_ode_step.1} parent=1 // pred_check
      _
    $region19: #{gru_ode_step.1} parent=1 // pred_check_branch
      %42 = sbr.rel (0) target = $region21
    $region20: #{gru_ode_step.1} parent=1 // pred_region
      %43 = dma.done [#allocation4], 4096
    $region21: #{gru_ode_step.1} parent=1 // pred_fallthru
      _
    // Predicated region
    $region22: #{gru_ode_step.1} parent=1 // pred_check
      _
    $region23: #{gru_ode_step.1} parent=1 // pred_check_branch
      %45 = sbr.rel (0) target = $region25
    $region24: #{gru_ode_step.1} parent=1 // pred_region
      %46 = dma.done [#allocation7], 2048
    $region25: #{gru_ode_step.1} parent=1 // pred_fallthru
      _
    %v47 = vld [vmem:[%s1] sm:$0xff]
    %v48 = vld [vmem:[#allocation3] sm:$0xff]
    %v49 = vld [vmem:[#allocation3 + $0x8] sm:$0xff]
    %v50 = vld [vmem:[#allocation3 + $0x10] sm:$0xff]
    %v51 = vld [vmem:[#allocation3 + $0x18] sm:$0xff]
    %v52 = vld [vmem:[#allocation3 + $0x20] sm:$0xff]
    %v53 = vld [vmem:[#allocation3 + $0x28] sm:$0xff]
    %v54 = vld [vmem:[#allocation3 + $0x30] sm:$0xff]
    %v55 = vld [vmem:[#allocation3 + $0x38] sm:$0xff]
    %v56 = vld [vmem:[#allocation3 + $0x40] sm:$0xff]
    %v57 = vld [vmem:[#allocation3 + $0x48] sm:$0xff]
    %v58 = vld [vmem:[#allocation3 + $0x50] sm:$0xff]
    %v59 = vld [vmem:[#allocation3 + $0x58] sm:$0xff]
    %v60 = vld [vmem:[#allocation3 + $0x60] sm:$0xff]
    %v61 = vld [vmem:[#allocation3 + $0x68] sm:$0xff]
    %v62 = vld [vmem:[#allocation3 + $0x70] sm:$0xff]
    %v63 = vld [vmem:[#allocation3 + $0x78] sm:$0xff]
    %v64 = vld [vmem:[#allocation3 + $0x80] sm:$0xff]
    %v65 = vld [vmem:[#allocation3 + $0x88] sm:$0xff]
    %v66 = vld [vmem:[#allocation3 + $0x90] sm:$0xff]
    %v67 = vld [vmem:[#allocation3 + $0x98] sm:$0xff]
    %v68 = vld [vmem:[#allocation3 + $0xa0] sm:$0xff]
    %v69 = vld [vmem:[#allocation3 + $0xa8] sm:$0xff]
    %v70 = vld [vmem:[#allocation3 + $0xb0] sm:$0xff]
    %v71 = vld [vmem:[#allocation3 + $0xb8] sm:$0xff]
    %v72 = vld [vmem:[#allocation3 + $0xc0] sm:$0xff]
    %v73 = vld [vmem:[#allocation3 + $0xc8] sm:$0xff]
    %v74 = vld [vmem:[#allocation3 + $0xd0] sm:$0xff]
    %v75 = vld [vmem:[#allocation3 + $0xd8] sm:$0xff]
    %v76 = vld [vmem:[#allocation3 + $0xe0] sm:$0xff]
    %v77 = vld [vmem:[#allocation3 + $0xe8] sm:$0xff]
    %v78 = vld [vmem:[#allocation3 + $0xf0] sm:$0xff]
    %v79 = vld [vmem:[#allocation3 + $0xf8] sm:$0xff]
    %80 = vmatprep.subr.mxu0 %v49
    %81 = vmatpush1.msra.mxu0 %v48
    %82 = vmatprep.subr.mxu0 %v51
    %83 = vmatpush1.msra.mxu0 %v50
    %84 = vmatprep.subr.mxu0 %v53
    %85 = vmatpush1.msra.mxu0 %v52
    %86 = vmatprep.subr.mxu0 %v55
    %87 = vmatpush1.msra.mxu0 %v54
    %88 = vmatprep.subr.mxu0 %v57
    %89 = vmatpush1.msra.mxu0 %v56
    %90 = vmatprep.subr.mxu0 %v59
    %91 = vmatpush1.msra.mxu0 %v58
    %92 = vmatprep.subr.mxu0 %v61
    %93 = vmatpush1.msra.mxu0 %v60
    %94 = vmatprep.subr.mxu0 %v63
    %95 = vmatpush1.msra.mxu0 %v62
    %96 = vmatprep.subr.mxu0 %v65
    %97 = vmatpush1.msra.mxu0 %v64
    %98 = vmatprep.subr.mxu0 %v67
    %99 = vmatpush1.msra.mxu0 %v66
    %100 = vmatprep.subr.mxu0 %v69
    %101 = vmatpush1.msra.mxu0 %v68
    %102 = vmatprep.subr.mxu0 %v71
    %103 = vmatpush1.msra.mxu0 %v70
    %104 = vmatprep.subr.mxu0 %v73
    %105 = vmatpush1.msra.mxu0 %v72
    %106 = vmatprep.subr.mxu0 %v75
    %107 = vmatpush1.msra.mxu0 %v74
    %108 = vmatprep.subr.mxu0 %v77
    %109 = vmatpush1.msra.mxu0 %v76
    %110 = vmatprep.subr.mxu0 %v79
    %111 = vmatpush1.msra.mxu0 %v78
    %112 = vmatprep.subr.mxu0 0.0
    %113 = vmatpush1.msra.mxu0 0.0
    %114 = vmatprep.subr.mxu0 0.0
    %115 = vmatpush1.msra.mxu0 0.0
    %116 = vmatprep.subr.mxu0 0.0
    %117 = vmatpush1.msra.mxu0 0.0
    %118 = vmatprep.subr.mxu0 0.0
    %119 = vmatpush1.msra.mxu0 0.0
    %120 = vmatprep.subr.mxu0 0.0
    %121 = vmatpush1.msra.mxu0 0.0
    %122 = vmatprep.subr.mxu0 0.0
    %123 = vmatpush1.msra.mxu0 0.0
    %124 = vmatprep.subr.mxu0 0.0
    %125 = vmatpush1.msra.mxu0 0.0
    %126 = vmatprep.subr.mxu0 0.0
    %127 = vmatpush1.msra.mxu0 0.0
    %128 = vmatprep.subr.mxu0 0.0
    %129 = vmatpush1.msra.mxu0 0.0
    %130 = vmatprep.subr.mxu0 0.0
    %131 = vmatpush1.msra.mxu0 0.0
    %132 = vmatprep.subr.mxu0 0.0
    %133 = vmatpush1.msra.mxu0 0.0
    %134 = vmatprep.subr.mxu0 0.0
    %135 = vmatpush1.msra.mxu0 0.0
    %136 = vmatprep.subr.mxu0 0.0
    %137 = vmatpush1.msra.mxu0 0.0
    %138 = vmatprep.subr.mxu0 0.0
    %139 = vmatpush1.msra.mxu0 0.0
    %140 = vmatprep.subr.mxu0 0.0
    %141 = vmatpush1.msra.mxu0 0.0
    %142 = vmatprep.subr.mxu0 0.0
    %143 = vmatpush1.msra.mxu0 0.0
    %144 = vmatprep.mubr.f32.mxu0 0.0
    %145 = vmatmul.mubr.f32.gmra.mrb[0].mxu0 %v47
    %v146 = vpop.f32.mrb[0].mxu0
    %v147 = vadd.f32 0.0, %v146
    %v148 = vpop.f32.mrb[0].mxu0
    %v149 = vadd.f32 0.0, %v148
    %150 = vdwg.mxu0
    %v151 = vxor.u32 %v147, 2147483648
    %v152 = vmul.f32 %v151, 1.442695
    %v153 = vpow.pop %v152
    %v154 = vadd.f32 %v153, 1.0
    %v155 = vrcp.pop %v154
    %v156 = vmul.f32 1.0, %v155
    %v157 = vxor.u32 %v149, 2147483648
    %v158 = vmul.f32 %v157, 1.442695
    %v159 = vpow.pop %v158
    %v160 = vadd.f32 %v159, 1.0
    %v161 = vrcp.pop %v160
    %v162 = vmul.f32 1.0, %v161
    %v163 = vmul.f32 %v156, %v47
    %v164 = vld [vmem:[#allocation6] sm:$0xff]
    %v165 = vld [vmem:[#allocation6 + $0x8] sm:$0xff]
    %v166 = vld [vmem:[#allocation6 + $0x10] sm:$0xff]
    %v167 = vld [vmem:[#allocation6 + $0x18] sm:$0xff]
    %v168 = vld [vmem:[#allocation6 + $0x20] sm:$0xff]
    %v169 = vld [vmem:[#allocation6 + $0x28] sm:$0xff]
    %v170 = vld [vmem:[#allocation6 + $0x30] sm:$0xff]
    %v171 = vld [vmem:[#allocation6 + $0x38] sm:$0xff]
    %v172 = vld [vmem:[#allocation6 + $0x40] sm:$0xff]
    %v173 = vld [vmem:[#allocation6 + $0x48] sm:$0xff]
    %v174 = vld [vmem:[#allocation6 + $0x50] sm:$0xff]
    %v175 = vld [vmem:[#allocation6 + $0x58] sm:$0xff]
    %v176 = vld [vmem:[#allocation6 + $0x60] sm:$0xff]
    %v177 = vld [vmem:[#allocation6 + $0x68] sm:$0xff]
    %v178 = vld [vmem:[#allocation6 + $0x70] sm:$0xff]
    %v179 = vld [vmem:[#allocation6 + $0x78] sm:$0xff]
    %180 = vmatprep.subr.mxu0 0.0
    %181 = vmatpush1.msra.mxu0 %v164
    %182 = vmatprep.subr.mxu0 0.0
    %183 = vmatpush1.msra.mxu0 %v165
    %184 = vmatprep.subr.mxu0 0.0
    %185 = vmatpush1.msra.mxu0 %v166
    %186 = vmatprep.subr.mxu0 0.0
    %187 = vmatpush1.msra.mxu0 %v167
    %188 = vmatprep.subr.mxu0 0.0
    %189 = vmatpush1.msra.mxu0 %v168
    %190 = vmatprep.subr.mxu0 0.0
    %191 = vmatpush1.msra.mxu0 %v169
    %192 = vmatprep.subr.mxu0 0.0
    %193 = vmatpush1.msra.mxu0 %v170
    %194 = vmatprep.subr.mxu0 0.0
    %195 = vmatpush1.msra.mxu0 %v171
    %196 = vmatprep.subr.mxu0 0.0
    %197 = vmatpush1.msra.mxu0 %v172
    %198 = vmatprep.subr.mxu0 0.0
    %199 = vmatpush1.msra.mxu0 %v173
    %200 = vmatprep.subr.mxu0 0.0
    %201 = vmatpush1.msra.mxu0 %v174
    %202 = vmatprep.subr.mxu0 0.0
    %203 = vmatpush1.msra.mxu0 %v175
    %204 = vmatprep.subr.mxu0 0.0
    %205 = vmatpush1.msra.mxu0 %v176
    %206 = vmatprep.subr.mxu0 0.0
    %207 = vmatpush1.msra.mxu0 %v177
    %208 = vmatprep.subr.mxu0 0.0
    %209 = vmatpush1.msra.mxu0 %v178
    %210 = vmatprep.subr.mxu0 0.0
    %211 = vmatpush1.msra.mxu0 %v179
    %212 = vmatprep.subr.mxu0 0.0
    %213 = vmatpush1.msra.mxu0 0.0
    %214 = vmatprep.subr.mxu0 0.0
    %215 = vmatpush1.msra.mxu0 0.0
    %216 = vmatprep.subr.mxu0 0.0
    %217 = vmatpush1.msra.mxu0 0.0
    %218 = vmatprep.subr.mxu0 0.0
    %219 = vmatpush1.msra.mxu0 0.0
    %220 = vmatprep.subr.mxu0 0.0
    %221 = vmatpush1.msra.mxu0 0.0
    %222 = vmatprep.subr.mxu0 0.0
    %223 = vmatpush1.msra.mxu0 0.0
    %224 = vmatprep.subr.mxu0 0.0
    %225 = vmatpush1.msra.mxu0 0.0
    %226 = vmatprep.subr.mxu0 0.0
    %227 = vmatpush1.msra.mxu0 0.0
    %228 = vmatprep.subr.mxu0 0.0
    %229 = vmatpush1.msra.mxu0 0.0
    %230 = vmatprep.subr.mxu0 0.0
    %231 = vmatpush1.msra.mxu0 0.0
    %232 = vmatprep.subr.mxu0 0.0
    %233 = vmatpush1.msra.mxu0 0.0
    %234 = vmatprep.subr.mxu0 0.0
    %235 = vmatpush1.msra.mxu0 0.0
    %236 = vmatprep.subr.mxu0 0.0
    %237 = vmatpush1.msra.mxu0 0.0
    %238 = vmatprep.subr.mxu0 0.0
    %239 = vmatpush1.msra.mxu0 0.0
    %240 = vmatprep.subr.mxu0 0.0
    %241 = vmatpush1.msra.mxu0 0.0
    %242 = vmatprep.subr.mxu0 0.0
    %243 = vmatpush1.msra.mxu0 0.0
    %244 = vmatprep.mubr.f32.mxu0 0.0
    %245 = vmatmul.mubr.f32.gmra.mrb[0].mxu0 %v163
    %v246 = vpop.f32.mrb[0].mxu0
    %v247 = vadd.f32 0.0, %v246
    %v248 = vpop.f32.mrb[0].mxu0
    %249 = vdwg.mxu0
    %v250 = vtanh.pop %v247
    %s251 = sld [smem:[#allocation2]]
    %v252 = vsub.f32 1.0, %v162
    %v253 = vsub.f32 %v250, %v47
    %v254 = vmul.f32 %v252, %v253
    %v255 = vstv %s251
    %v256 = vmul.f32 %v254, %v255
    %257 = vst [vmem:[#allocation8] sm:$0xff] %v256
    // Predicated region
    $region26: #{gru_ode_step.1} parent=1 // pred_check
      _
    $region27: #{gru_ode_step.1} parent=1 // pred_check_branch
      %259 = sbr.rel (0) target = $region29
    $region28: #{gru_ode_step.1} parent=1 // pred_region
      %s261 = ssub.s32 128, 128
      %262 = vsyncadd [#allocation5], %s261
      %s264 = sshll.u32 [#allocation8], 4
      %s265 = int_to_ptr.vmem [resolvable:$true] %s264
      %267 = dma.vmem_to_hbm [thread:$0]  %s265, 128, %s4, [#allocation5]
    $region29: #{gru_ode_step.1} parent=1 // pred_fallthru
      _
    // Predicated region
    $region30: #{gru_ode_step.1} parent=1 // pred_check
      _
    $region31: #{gru_ode_step.1} parent=1 // pred_check_branch
      %269 = sbr.rel (0) target = $region33
    $region32: #{gru_ode_step.1} parent=1 // pred_region
      %270 = dma.done [#allocation5], 128
    $region33: #{gru_ode_step.1} parent=1 // pred_fallthru
      _
    %271 = vsyncpa [#allocation4], 1
    %272 = vsyncpa [#allocation7], 1
    %273 = vsyncpa [#allocation5], 1

</llo_original>
